<compile_context>
chip_gen: v7x
topology: tpu7x:2x2x1
jax: 0.10.0
libtpu: 0.0.40
codegen_flags: <defaults>
</compile_context>

<pallas_src>
import jax
import jax.numpy as jnp
from jax.experimental import pallas as pl
from jax.experimental.pallas import tpu as pltpu


def _round_up(x: int, m: int) -> int:
    return ((x + m - 1) // m) * m


def _linear_kernel(x_ref, w_ref, b_ref, o_ref, acc_ref):
    """Computes one (tm, tc) output tile; K (embed_dim) is the last grid axis."""
    k = pl.program_id(2)

    @pl.when(k == 0)
    def _init():
        acc_ref[...] = jnp.zeros_like(acc_ref)

    acc_ref[...] += jnp.dot(
        x_ref[...], w_ref[...], preferred_element_type=jnp.float32
    )

    @pl.when(k == pl.num_programs(2) - 1)
    def _finalize():
        o_ref[...] = (acc_ref[...] + b_ref[...].astype(jnp.float32)).astype(o_ref.dtype)


def _vmem_budget_bytes() -> int:
    """~75% of physical per-core VMEM (~48 MiB on v7x, ~96 MiB on v5e/v6e)."""
    phys = None
    try:
        phys = getattr(pltpu.get_tpu_info(), "vmem_capacity_bytes", None)
    except Exception:
        phys = None
    if not phys:
        phys = 64 << 20  # conservative fallback: v7x per-TensorCore VMEM
    return (int(phys) * 3) // 4


def continual_classifier_forward(x, weight, bias, *, force_pallas=False):
    """x: (B, D); weight: (C, D) (PyTorch nn.Linear layout); bias: (C,) -> (B, C)."""
    B, D = x.shape
    C, D2 = weight.shape
    assert D == D2, "weight must be (nb_classes, embed_dim)"
    assert bias.shape == (C,)

    # ---- Fast path: tiny problems are dominated by pallas_call / padding overhead ----
    if not force_pallas and B * C * D < (1 << 20):
        return (x @ weight.T + bias[None, :]).astype(x.dtype)

    itemsize = jnp.dtype(x.dtype).itemsize
    out_isz = itemsize
    sub = {4: 8, 2: 16, 1: 32}.get(itemsize, 8)      # sublane alignment per dtype
    budget = _vmem_budget_bytes()

    # ---- Tile selection (budget-driven; shrink tk -> tc -> tm) -----------------------
    tm = min(512, _round_up(B, sub))                 # batch tile: large, sublane-aligned
    tc = min(512, _round_up(C, 128))                 # class tile: lane-dense (128 mult.)
    tk = 1024 if D > 1024 else D                     # full-D block when D is small

    def _step_bytes(tm_, tc_, tk_):
        # double-buffered x / w / bias input tiles + double-buffered output tile
        # + single f32 accumulator scratch
        return (2 * itemsize * (tm_ * tk_ + tk_ * tc_ + tc_)
                + 2 * out_isz * tm_ * tc_
                + 4 * tm_ * tc_)

    while _step_bytes(tm, tc, tk) > budget and tk != D and tk > 256:
        tk //= 2
    while _step_bytes(tm, tc, tk) > budget and tc > 128:
        tc = _round_up(tc // 2, 128)
    while _step_bytes(tm, tc, tk) > budget and tm > sub:
        tm = _round_up(tm // 2, sub)

    d_pad = D if tk == D else _round_up(D, tk)
    k_tiles = d_pad // tk
    B_pad = _round_up(B, tm)
    C_pad = _round_up(C, tc)
    b_tiles = B_pad // tm
    c_tiles = C_pad // tc

    # ---- v7x megacore: both TensorCores need >=2 blocks on a parallel axis -----------
    if b_tiles == 1 and c_tiles == 1 and 2 * B_pad * d_pad * C_pad >= int(1e8):
        if tc >= 256:
            tc = _round_up(tc // 2, 128)
        elif tm >= 2 * sub:
            tm = _round_up(tm // 2, sub)
        B_pad = _round_up(B, tm)
        C_pad = _round_up(C, tc)
        b_tiles = B_pad // tm
        c_tiles = C_pad // tc

    # ---- Pad operands; transpose weight ONCE in the wrapper to (D, C) ----------------
    x_p = x
    if (B_pad, d_pad) != (B, D):
        x_p = jnp.pad(x, ((0, B_pad - B), (0, d_pad - D)))
    w_t = weight.T                                   # (D, C): no per-step MXU transpose
    if (d_pad, C_pad) != (D, C):
        w_t = jnp.pad(w_t, ((0, d_pad - D), (0, C_pad - C)))
    b_p = bias if C_pad == C else jnp.pad(bias, (0, C_pad - C))
    b_p = b_p.reshape(1, C_pad)

    # ---- Grid order: larger operand on the outer (slow) axis -> streamed only once ---
    class_outer = C_pad >= B_pad
    if class_outer:
        grid = (c_tiles, b_tiles, k_tiles)
        x_map = lambda c, b, k: (b, k)
        w_map = lambda c, b, k: (k, c)
        bias_map = lambda c, b, k: (0, c)
        out_map = lambda c, b, k: (b, c)
    else:
        grid = (b_tiles, c_tiles, k_tiles)
        x_map = lambda b, c, k: (b, k)
        w_map = lambda b, c, k: (k, c)
        bias_map = lambda b, c, k: (0, c)
        out_map = lambda b, c, k: (b, c)

    # ---- Scheduler / compiler hints (real DMA traffic for the chosen loop order) -----
    if k_tiles == 1:
        x_reads, w_reads = (c_tiles, 1) if class_outer else (1, b_tiles)
    else:
        x_reads, w_reads = c_tiles, b_tiles
    flops = 2 * B_pad * d_pad * C_pad
    bytes_accessed = int(
        itemsize * (B_pad * d_pad * x_reads + d_pad * C_pad * w_reads + C_pad)
        + out_isz * B_pad * C_pad)
    # _step_bytes already includes double-buffering; just add headroom, cap at the budget.
    vmem_limit = int(min(budget, max(32 << 20, int(1.25 * _step_bytes(tm, tc, tk)))))

    out_pad = pl.pallas_call(
        _linear_kernel,
        out_shape=jax.ShapeDtypeStruct((B_pad, C_pad), x.dtype),
        grid_spec=pltpu.PrefetchScalarGridSpec(
            num_scalar_prefetch=0,
            grid=grid,
            in_specs=[
                pl.BlockSpec((tm, tk), x_map),       # activations tile
                pl.BlockSpec((tk, tc), w_map),       # weight tile (already (D, C))
                pl.BlockSpec((1, tc), bias_map),     # bias tile
            ],
            out_specs=pl.BlockSpec((tm, tc), out_map),
            scratch_shapes=[pltpu.VMEM((tm, tc), jnp.float32)],
        ),
        compiler_params=pltpu.CompilerParams(
            dimension_semantics=("parallel", "parallel", "arbitrary"),
            vmem_limit_bytes=vmem_limit,
        ),
        cost_estimate=pl.CostEstimate(
            flops=flops, transcendentals=0, bytes_accessed=bytes_accessed),
    )(x_p, w_t, b_p)

    # Slice away batch/class padding (no-op when nothing was padded).
    return out_pad[:B, :C]


# TODO(synk): reset_parameters / add_new_outputs are parameter-management utilities
# (no forward compute) and are intentionally not kernelized.

if __name__ == "__main__":
    key = jax.random.PRNGKey(0)

    def make_inputs(k, B, D, C):
        kx, kw, kb = jax.random.split(k, 3)
        bound = 1.0 / jnp.sqrt(float(D))   # nn.Linear reset_parameters-style init
        x = jax.random.normal(kx, (B, D), dtype=jnp.float32)
        w = jax.random.uniform(kw, (C, D), minval=-bound, maxval=bound, dtype=jnp.float32)
        b = jax.random.uniform(kb, (C,), minval=-bound, maxval=bound, dtype=jnp.float32)
        return x, w, b

    k1, k2, k3 = jax.random.split(key, 3)

    # 1) Toy shapes consistent with the module (forced through the Pallas path).
    x, w, b = make_inputs(k1, 8, 32, 16)
    out = jax.block_until_ready(continual_classifier_forward(x, w, b, force_pallas=True))
    ref = x @ w.T + b
    assert out.shape == (8, 16)
    assert jnp.allclose(out, ref, atol=1e-4, rtol=1e-4), "toy case mismatch"

    # 2) Small unaligned case (classes padded to lane multiple, full-D block, no K tiling).
    x, w, b = make_inputs(k2, 64, 256, 384)
    out = jax.block_until_ready(continual_classifier_forward(x, w, b))
    ref = x @ w.T + b
    assert jnp.allclose(out, ref, atol=1e-4, rtol=1e-4), "mid case mismatch"

    # 3) K-tiled case (embed_dim > 1024 exercises the accumulator init/finalize path).
    x, w, b = make_inputs(k3, 16, 1536, 200)
    out = jax.block_until_ready(continual_classifier_forward(x, w, b))
    ref = x @ w.T + b
    assert jnp.allclose(out, ref, atol=1e-4, rtol=1e-4), "K-tiled case mismatch"

    print("KERNEL_OK")
</pallas_src>

<mosaic_0001>
module attributes {stable_mosaic.version = 11 : i64} {
  func.func @_linear_kernel(%arg0: i32, %arg1: i32, %arg2: i32, %arg3: memref<8x32xf32, #tpu.memory_space<vmem>>, %arg4: memref<32x128xf32, #tpu.memory_space<vmem>>, %arg5: memref<1x128xf32, #tpu.memory_space<vmem>>, %arg6: memref<8x128xf32, #tpu.memory_space<vmem>>, %arg7: memref<8x128xf32, #tpu.memory_space<vmem>>) attributes {dimension_semantics = [#tpu.dimension_semantics<parallel>, #tpu.dimension_semantics<parallel>, #tpu.dimension_semantics<arbitrary>], iteration_bounds = array<i64: 1, 1, 1>, scalar_prefetch = 0 : i64, scratch_operands = 1 : i64, tpu.core_type = #tpu.core_type<tc>, window_params = [{transform_indices = @transform_0, window_bounds = array<i64: 8, 32>}, {transform_indices = @transform_1, window_bounds = array<i64: 32, 128>}, {transform_indices = @transform_2, window_bounds = array<i64: 1, 128>}, {transform_indices = @transform_3, window_bounds = array<i64: 8, 128>}]} {
    %c0_i32 = arith.constant 0 : i32
    %0 = arith.cmpi eq, %arg2, %c0_i32 : i32
    %1 = arith.extui %0 : i1 to i32
    %c0_i32_0 = arith.constant 0 : i32
    %2 = arith.cmpi ne, %1, %c0_i32_0 : i32
    scf.if %2 {
      %cst_10 = arith.constant 0.000000e+00 : f32
      %12 = vector.broadcast %cst_10 : f32 to vector<8x128xf32>
      %c0_11 = arith.constant 0 : index
      %c0_12 = arith.constant 0 : index
      %13 = vector.load %arg7[%c0_11, %c0_12] : memref<8x128xf32, #tpu.memory_space<vmem>>, vector<8x128xf32>
      tpu.vector_store %arg7[%c0_11, %c0_12], %12 {strides = array<i32>} : memref<8x128xf32, #tpu.memory_space<vmem>>, vector<8x128xf32>,
    } else {
    }
    %c0 = arith.constant 0 : index
    %c0_1 = arith.constant 0 : index
    %3 = vector.load %arg7[%c0, %c0_1] : memref<8x128xf32, #tpu.memory_space<vmem>>, vector<8x128xf32>
    %c0_2 = arith.constant 0 : index
    %c0_3 = arith.constant 0 : index
    %4 = vector.load %arg3[%c0_2, %c0_3] : memref<8x32xf32, #tpu.memory_space<vmem>>, vector<8x32xf32>
    %c0_4 = arith.constant 0 : index
    %c0_5 = arith.constant 0 : index
    %5 = vector.load %arg4[%c0_4, %c0_5] : memref<32x128xf32, #tpu.memory_space<vmem>>, vector<32x128xf32>
    %cst = arith.constant dense<0.000000e+00> : vector<8x128xf32>
    %6 = tpu.matmul %4, %5, %cst {dimension_numbers = #tpu.dot_dimension_numbers<[1], [0], [0], [1], [0, 0, 1, 1], [], []>} : vector<8x32xf32>, vector<32x128xf32>, vector<8x128xf32> -> vector<8x128xf32>
    %7 = arith.addf %3, %6 : vector<8x128xf32>
    %c0_6 = arith.constant 0 : index
    %c0_7 = arith.constant 0 : index
    %8 = vector.load %arg7[%c0_6, %c0_7] : memref<8x128xf32, #tpu.memory_space<vmem>>, vector<8x128xf32>
    tpu.vector_store %arg7[%c0_6, %c0_7], %7 {strides = array<i32>} : memref<8x128xf32, #tpu.memory_space<vmem>>, vector<8x128xf32>,
    %c0_i32_8 = arith.constant 0 : i32
    %9 = arith.cmpi eq, %arg2, %c0_i32_8 : i32
    %10 = arith.extui %9 : i1 to i32
    %c0_i32_9 = arith.constant 0 : i32
    %11 = arith.cmpi ne, %10, %c0_i32_9 : i32
    scf.if %11 {
      %c0_10 = arith.constant 0 : index
      %c0_11 = arith.constant 0 : index
      %12 = vector.load %arg7[%c0_10, %c0_11] : memref<8x128xf32, #tpu.memory_space<vmem>>, vector<8x128xf32>
      %c0_12 = arith.constant 0 : index
      %c0_13 = arith.constant 0 : index
      %13 = vector.load %arg5[%c0_12, %c0_13] : memref<1x128xf32, #tpu.memory_space<vmem>>, vector<1x128xf32>
      %14 = vector.broadcast %13 : vector<1x128xf32> to vector<8x128xf32>
      %15 = arith.addf %12, %14 : vector<8x128xf32>
      %c0_14 = arith.constant 0 : index
      %c0_15 = arith.constant 0 : index
      %16 = vector.load %arg6[%c0_14, %c0_15] : memref<8x128xf32, #tpu.memory_space<vmem>>, vector<8x128xf32>
      tpu.vector_store %arg6[%c0_14, %c0_15], %15 {strides = array<i32>} : memref<8x128xf32, #tpu.memory_space<vmem>>, vector<8x128xf32>,
    } else {
    }
    return
  }
  func.func @transform_0(%arg0: i32, %arg1: i32, %arg2: i32) -> (i32, i32) {
    %c0_i32 = arith.constant 0 : i32
    return %arg1, %arg2 : i32, i32
  }
  func.func @transform_1(%arg0: i32, %arg1: i32, %arg2: i32) -> (i32, i32) {
    %c0_i32 = arith.constant 0 : i32
    return %arg2, %arg0 : i32, i32
  }
  func.func @transform_2(%arg0: i32, %arg1: i32, %arg2: i32) -> (i32, i32) {
    %c0_i32 = arith.constant 0 : i32
    %c0_i32_0 = arith.constant 0 : i32
    return %c0_i32, %arg0 : i32, i32
  }
  func.func @transform_3(%arg0: i32, %arg1: i32, %arg2: i32) -> (i32, i32) {
    %c0_i32 = arith.constant 0 : i32
    return %arg1, %arg0 : i32, i32
  }
}

</mosaic_0001>

<llo_original>
// kernel: tpu_custom_call.1
$region0: #{tpu_custom_call.1}
  #allocation0 [shape = 'u32[]', space=smem, size = 0x4, offset = 0x4, fixed_abs, tag = 'smem constant byte address 0x4 - core index']
  #allocation1 [shape = 'u32[144,128]{1,0:T(1,128)}', space=vmem, size = 0x12000, scoped, tag = 'internal scratch']
  #allocation2 [shape = 'f32[8,128]{1,0:T(8,128)}', space=vmem, size = 0x1000, scoped, tag = 'scratch operand']
  %s0 = inlined_call_operand.hbm [shape: f32[8,32], index: 0, kind: input, shape index: {}]
  %s1 = inlined_call_operand.hbm [shape: f32[32,128], index: 1, kind: input, shape index: {}]
  %s2 = inlined_call_operand.vmem [shape: f32[1,128], index: 2, kind: input, shape index: {}]
  %s3 = inlined_call_operand.hbm [shape: f32[8,128], index: 3, kind: output, shape index: {}]
  %s4 = sld [smem:[#allocation0]]
  $region38: #{tpu_custom_call.1} parent=0
    _
  %s6 = ssub.s32 1, %s4
  %s7 = scalar_select 0, %s6, %s4
  $region1: #{tpu_custom_call.1} parent=0
    #allocation3 [shape = 'u8[4096]{0}', space=vmem, size = 0x1000, scoped, tag = 'input window, operand 0, single buffered']
    #allocation4 [shape = 's32[1]{0}', space=sflag, size = 0x4, scoped, tag = 'scoped memory for tpu_custom_call.1']
    #allocation5 [shape = 's32[1]{0}', space=sflag, size = 0x4, scoped, tag = 'scoped memory for tpu_custom_call.1']
    #allocation6 [shape = 'u8[16384]{0}', space=vmem, size = 0x4000, scoped, tag = 'input window, operand 1, single buffered']
    #allocation7 [shape = 's32[1]{0}', space=sflag, size = 0x4, scoped, tag = 'scoped memory for tpu_custom_call.1']
    #allocation8 [shape = 'u8[4096]{0}', space=vmem, size = 0x1000, scoped, tag = 'output window, operand 0, single buffered']
    %8 = vsyncpa [#allocation4], 0
    %9 = vsyncpa [#allocation7], 0
    %10 = vsyncpa [#allocation5], 0
    // Predicated region
    $region2: #{tpu_custom_call.1} parent=1 // pred_check
      _
    $region3: #{tpu_custom_call.1} parent=1 // pred_check_branch
      %12 = sbr.rel (0) target = $region5
    $region4: #{tpu_custom_call.1} parent=1 // pred_region
      %s14 = ssub.s32 128, 128
      %15 = vsyncadd [#allocation4], %s14
      %s17 = sshll.u32 [#allocation3], 4
      %s18 = int_to_ptr.vmem [resolvable:$true] %s17
      %20 = dma.hbm_to_vmem [thread:$0]  %s0, 128, %s18, [#allocation4]
    $region5: #{tpu_custom_call.1} parent=1 // pred_fallthru
      _
    // Predicated region
    $region6: #{tpu_custom_call.1} parent=1 // pred_check
      _
    $region7: #{tpu_custom_call.1} parent=1 // pred_check_branch
      %22 = sbr.rel (0) target = $region9
    $region8: #{tpu_custom_call.1} parent=1 // pred_region
      %s24 = ssub.s32 512, 512
      %25 = vsyncadd [#allocation7], %s24
      %s26 = sshll.u32 [#allocation6], 4
      %s27 = int_to_ptr.vmem [resolvable:$true] %s26
      %32 = dma.hbm_to_vmem [thread:$0]  %s1, 512, %s27, [#allocation7], 128, 128, 8
    $region9: #{tpu_custom_call.1} parent=1 // pred_fallthru
      _
    // Predicated region
    $region10: #{tpu_custom_call.1} parent=1 // pred_check
      _
    $region11: #{tpu_custom_call.1} parent=1 // pred_check_branch
      %34 = sbr.rel (0) target = $region13
    $region12: #{tpu_custom_call.1} parent=1 // pred_region
      _
    $region13: #{tpu_custom_call.1} parent=1 // pred_fallthru
      _
    // Predicated region
    $region14: #{tpu_custom_call.1} parent=1 // pred_check
      _
    $region15: #{tpu_custom_call.1} parent=1 // pred_check_branch
      %36 = sbr.rel (0) target = $region17
    $region16: #{tpu_custom_call.1} parent=1 // pred_region
      %37 = dma.done [#allocation4], 128
    $region17: #{tpu_custom_call.1} parent=1 // pred_fallthru
      _
    // Predicated region
    $region18: #{tpu_custom_call.1} parent=1 // pred_check
      _
    $region19: #{tpu_custom_call.1} parent=1 // pred_check_branch
      %39 = sbr.rel (0) target = $region21
    $region20: #{tpu_custom_call.1} parent=1 // pred_region
      %40 = dma.done [#allocation7], 512
    $region21: #{tpu_custom_call.1} parent=1 // pred_fallthru
      _
    %p41 = scmp.eq.s32.totalorder 0, 0
    // Predicated region
    $region22: #{tpu_custom_call.1} parent=1 // pred_check
      %p42 = pneg %p41
    $region23: #{tpu_custom_call.1} parent=1 // pred_check_branch
      %44 = sbr.rel (%p42) target = $region25
    $region24: #{tpu_custom_call.1} parent=1 // pred_region
      %45 = vst [vmem:[#allocation2] sm:$0xff] 0.0
    $region25: #{tpu_custom_call.1} parent=1 // pred_fallthru
      _
    %v46 = vld [vmem:[#allocation2] sm:$0xff]
    %v47 = vld [vmem:[#allocation3] sm:$0xff]
    %v48 = vld [vmem:[#allocation6] sm:$0xff]
    %v49 = vld [vmem:[#allocation6 + $0x8] sm:$0xff]
    %v50 = vld [vmem:[#allocation6 + $0x10] sm:$0xff]
    %v51 = vld [vmem:[#allocation6 + $0x18] sm:$0xff]
    %vm52 = vcmask 261120
    %v54 = vsel %vm52, %v47, 0
    %56 = vmatprep.subr.mxu0 0.0
    %57 = vmatpush1.msra.mxu0 %v48
    %58 = vmatprep.subr.mxu0 0.0
    %59 = vmatpush1.msra.mxu0 %v49
    %60 = vmatprep.subr.mxu0 0.0
    %61 = vmatpush1.msra.mxu0 %v50
    %62 = vmatprep.subr.mxu0 0.0
    %63 = vmatpush1.msra.mxu0 %v51
    %64 = vmatprep.subr.mxu0 0.0
    %65 = vmatpush1.msra.mxu0 0.0
    %66 = vmatprep.subr.mxu0 0.0
    %67 = vmatpush1.msra.mxu0 0.0
    %68 = vmatprep.subr.mxu0 0.0
    %69 = vmatpush1.msra.mxu0 0.0
    %70 = vmatprep.subr.mxu0 0.0
    %71 = vmatpush1.msra.mxu0 0.0
    %72 = vmatprep.subr.mxu0 0.0
    %73 = vmatpush1.msra.mxu0 0.0
    %74 = vmatprep.subr.mxu0 0.0
    %75 = vmatpush1.msra.mxu0 0.0
    %76 = vmatprep.subr.mxu0 0.0
    %77 = vmatpush1.msra.mxu0 0.0
    %78 = vmatprep.subr.mxu0 0.0
    %79 = vmatpush1.msra.mxu0 0.0
    %80 = vmatprep.subr.mxu0 0.0
    %81 = vmatpush1.msra.mxu0 0.0
    %82 = vmatprep.subr.mxu0 0.0
    %83 = vmatpush1.msra.mxu0 0.0
    %84 = vmatprep.subr.mxu0 0.0
    %85 = vmatpush1.msra.mxu0 0.0
    %86 = vmatprep.subr.mxu0 0.0
    %87 = vmatpush1.msra.mxu0 0.0
    %88 = vmatprep.subr.mxu0 0.0
    %89 = vmatpush1.msra.mxu0 0.0
    %90 = vmatprep.subr.mxu0 0.0
    %91 = vmatpush1.msra.mxu0 0.0
    %92 = vmatprep.subr.mxu0 0.0
    %93 = vmatpush1.msra.mxu0 0.0
    %94 = vmatprep.subr.mxu0 0.0
    %95 = vmatpush1.msra.mxu0 0.0
    %96 = vmatprep.subr.mxu0 0.0
    %97 = vmatpush1.msra.mxu0 0.0
    %98 = vmatprep.subr.mxu0 0.0
    %99 = vmatpush1.msra.mxu0 0.0
    %100 = vmatprep.subr.mxu0 0.0
    %101 = vmatpush1.msra.mxu0 0.0
    %102 = vmatprep.subr.mxu0 0.0
    %103 = vmatpush1.msra.mxu0 0.0
    %104 = vmatprep.subr.mxu0 0.0
    %105 = vmatpush1.msra.mxu0 0.0
    %106 = vmatprep.subr.mxu0 0.0
    %107 = vmatpush1.msra.mxu0 0.0
    %108 = vmatprep.subr.mxu0 0.0
    %109 = vmatpush1.msra.mxu0 0.0
    %110 = vmatprep.subr.mxu0 0.0
    %111 = vmatpush1.msra.mxu0 0.0
    %112 = vmatprep.subr.mxu0 0.0
    %113 = vmatpush1.msra.mxu0 0.0
    %114 = vmatprep.subr.mxu0 0.0
    %115 = vmatpush1.msra.mxu0 0.0
    %116 = vmatprep.subr.mxu0 0.0
    %117 = vmatpush1.msra.mxu0 0.0
    %118 = vmatprep.subr.mxu0 0.0
    %119 = vmatpush1.msra.mxu0 0.0
    %120 = vmatprep.mubr.f32.mxu0 0.0
    %121 = vmatmul.mubr.f32.gmra.mrb[0].mxu0 %v54
    %v122 = vpop.f32.mrb[0].mxu0
    %v123 = vadd.f32 0.0, %v122
    %v124 = vpop.f32.mrb[0].mxu0
    %125 = vdwg.mxu0
    %v126 = vadd.f32 %v46, %v123
    %127 = vst [vmem:[#allocation2] sm:$0xff] %v126
    // Predicated region
    $region26: #{tpu_custom_call.1} parent=1 // pred_check
      %p128 = pneg %p41
    $region27: #{tpu_custom_call.1} parent=1 // pred_check_branch
      %130 = sbr.rel (%p128) target = $region29
    $region28: #{tpu_custom_call.1} parent=1 // pred_region
      %v131 = vld [vmem:[#allocation2] sm:$0xff]
      %v132 = vld [vmem:[%s2] sm:$0x1]
      %v134 = vlaneseq
      %v135 = vshrl.u32 %v134, 7
      %v136 = vsub.s32 0, %v135
      %v137 = vrot.slane %v132, %v136
      %v139 = vadd.f32 %v131, %v137
      %140 = vst [vmem:[#allocation8] sm:$0xff] %v139
    $region29: #{tpu_custom_call.1} parent=1 // pred_fallthru
      _
    // Predicated region
    $region30: #{tpu_custom_call.1} parent=1 // pred_check
      _
    $region31: #{tpu_custom_call.1} parent=1 // pred_check_branch
      %142 = sbr.rel (0) target = $region33
    $region32: #{tpu_custom_call.1} parent=1 // pred_region
      %s144 = ssub.s32 128, 128
      %145 = vsyncadd [#allocation5], %s144
      %s147 = sshll.u32 [#allocation8], 4
      %s148 = int_to_ptr.vmem [resolvable:$true] %s147
      %150 = dma.vmem_to_hbm [thread:$0]  %s148, 128, %s3, [#allocation5]
    $region33: #{tpu_custom_call.1} parent=1 // pred_fallthru
      _
    // Predicated region
    $region34: #{tpu_custom_call.1} parent=1 // pred_check
      _
    $region35: #{tpu_custom_call.1} parent=1 // pred_check_branch
      %152 = sbr.rel (0) target = $region37
    $region36: #{tpu_custom_call.1} parent=1 // pred_region
      %153 = dma.done [#allocation5], 128
    $region37: #{tpu_custom_call.1} parent=1 // pred_fallthru
      _
    %154 = vsyncpa [#allocation4], 1
    %155 = vsyncpa [#allocation7], 1
    %156 = vsyncpa [#allocation5], 1

</llo_original>
